<compile_context>
chip_gen: v7x
topology: tpu7x:2x2x1
jax: 0.10.0
libtpu: 0.0.40
codegen_flags: <defaults>
</compile_context>

<pallas_src>
import functools

import jax
import jax.numpy as jnp
from jax.experimental import pallas as pl
from jax.experimental.pallas import tpu as pltpu


def _round_up(x: int, m: int) -> int:
    return ((x + m - 1) // m) * m


# ---------------------------------------------------------------------------
# Pallas kernel: whole MLP fused for one N-tile.
#   refs = (x_ref, w_0, ..., w_{L-1}, bias_pack_ref, o_ref)
#   x_ref     : (tile_n, f_in)        activations (f32)
#   w_i       : (n_in_i, n_out_i)     weights in matmul dtype (bf16)
#   bias_pack : (L, max_fout)         biases (f32), row i zero-padded to max_fout
#   o_ref     : (tile_n, out_dim)
# ---------------------------------------------------------------------------
def _fused_mlp_kernel(*refs, num_layers: int, sigmoid_output: bool,
                      matmul_dtype, out_dims):
    x_ref = refs[0]
    w_refs = refs[1:1 + num_layers]
    b_ref = refs[1 + num_layers]
    o_ref = refs[2 + num_layers]

    h = x_ref[...].astype(matmul_dtype)
    for i in range(num_layers):
        w = w_refs[i][...]                               # (n_in, n_out), bf16
        b = b_ref[i:i + 1, :out_dims[i]]                 # (1, n_out), f32 (static slice)
        y = jnp.dot(h, w, preferred_element_type=jnp.float32) + b
        if i < num_layers - 1:
            # ReLU commutes with the downcast that feeds the next matmul, so
            # storing the hidden activation in bf16 is numerically identical
            # and halves the live vreg/VMEM footprint.
            h = jnp.maximum(y, 0.0).astype(matmul_dtype)
        else:
            h = y                                        # final layer stays f32
    if sigmoid_output:
        h = jax.nn.sigmoid(h)                            # f32 sigmoid (EUP)
    o_ref[...] = h.astype(o_ref.dtype)


def _fused_mlp(x2, weights_mm, bias_pack, *, out_dims, sigmoid_output,
               matmul_dtype=jnp.bfloat16, tile_n=512):
    """Run the fused MLP on x2 of shape (N, f_in).  Returns (N, out_dims[-1])."""
    n, f_in = x2.shape
    num_layers = len(weights_mm)
    out_dim = out_dims[-1]

    # Token-axis tiling.  Feature dims are never padded (blocks equal to the
    # full array dim along the lane axis are legal).
    if n <= tile_n:
        tn, n_pad, x_in = n, n, x2            # single block == full array
    else:
        tn = tile_n                           # multiple of 8
        n_pad = _round_up(n, tn)
        x_in = x2 if n_pad == n else jnp.pad(x2, ((0, n_pad - n), (0, 0)))
    grid = (n_pad // tn,)

    in_specs = [pl.BlockSpec((tn, f_in), lambda i: (i, 0))]
    operands = [x_in]
    for w in weights_mm:
        # Constant index_map: weights stay VMEM-resident across all N tiles.
        in_specs.append(pl.BlockSpec(w.shape, lambda i: (0, 0)))
        operands.append(w)
    in_specs.append(pl.BlockSpec(bias_pack.shape, lambda i: (0, 0)))
    operands.append(bias_pack)

    kernel = functools.partial(
        _fused_mlp_kernel,
        num_layers=num_layers,
        sigmoid_output=sigmoid_output,
        matmul_dtype=matmul_dtype,
        out_dims=tuple(out_dims),
    )

    # Explicit VMEM budget: double-buffered x/out tiles + resident weights and
    # biases, clamped between the 32 MiB scoped default and v7x's 64 MiB
    # physical VMEM so the same config is valid on v5e/v6e/v7x.
    weight_bytes = sum(w.size * w.dtype.itemsize for w in weights_mm)
    bias_bytes = bias_pack.size * bias_pack.dtype.itemsize
    block_bytes = 2 * (tn * f_in * 4 + tn * out_dim * 4) \
        + 2 * weight_bytes + 2 * bias_bytes
    vmem_limit = int(min(max(block_bytes + (4 << 20), 32 << 20), 64 << 20))
    # TODO(synk): if sum(W_i) ever outgrows the v7x budget (large hidden_dim),
    # switch weights to memory_space=pl.ANY and stream them per layer with
    # pltpu.emit_pipeline / make_async_copy instead of keeping them resident.

    cost = pl.CostEstimate(
        flops=2 * n_pad * sum(w.shape[0] * w.shape[1] for w in weights_mm),
        transcendentals=(n_pad * out_dim) if sigmoid_output else 0,
        bytes_accessed=int(x_in.size * x_in.dtype.itemsize + weight_bytes
                           + bias_bytes + n_pad * out_dim * 4),
    )

    out = pl.pallas_call(
        kernel,
        out_shape=jax.ShapeDtypeStruct((n_pad, out_dim), x2.dtype),
        grid_spec=pl.GridSpec(
            grid=grid,
            in_specs=in_specs,
            out_specs=pl.BlockSpec((tn, out_dim), lambda i: (i, 0)),
        ),
        compiler_params=pltpu.CompilerParams(
            # N tiles are independent; shards across v7x's 2 TCs only when
            # the grid has >= 2 steps (N > tile_n).
            dimension_semantics=("parallel",),
            vmem_limit_bytes=vmem_limit,
        ),
        cost_estimate=cost,
    )(*operands)

    return out if n_pad == n else out[:n]


# ---------------------------------------------------------------------------
# MLP module: parameter container + forward built on the fused Pallas kernel.
# Weights are stored as (in_features, out_features) so the kernel computes
# y = x @ W + b (equivalent to PyTorch nn.Linear's x @ W.T + b).
# ---------------------------------------------------------------------------
class MLP:
    def __init__(self, input_dim, hidden_dim, output_dim, num_layers,
                 sigmoid_output=False, *, key=None,
                 matmul_dtype=jnp.bfloat16, tile_n=512):
        self.num_layers = num_layers
        self.sigmoid_output = sigmoid_output
        self.output_dim = output_dim
        self.matmul_dtype = matmul_dtype
        self.tile_n = tile_n

        h = [hidden_dim] * (num_layers - 1)
        dims = list(zip([input_dim] + h, h + [output_dim]))
        self.out_dims = tuple(k for _, k in dims)
        max_fout = max(self.out_dims)

        if key is None:
            key = jax.random.PRNGKey(0)

        self.weights, self.biases = [], []     # f32 reference params
        self.weights_mm = []                   # bf16 kernel params (unpadded)
        bias_rows = []
        for n_in, n_out in dims:
            key, kw, kb = jax.random.split(key, 3)
            bound = 1.0 / (n_in ** 0.5)
            w = jax.random.uniform(kw, (n_in, n_out), jnp.float32, -bound, bound)
            b = jax.random.uniform(kb, (n_out,), jnp.float32, -bound, bound)
            self.weights.append(w)
            self.biases.append(b)
            self.weights_mm.append(w.astype(matmul_dtype))
            bias_rows.append(jnp.zeros((max_fout,), jnp.float32).at[:n_out].set(b))
        # One packed (L, max_fout) bias operand instead of L separate inputs.
        self.bias_pack = jnp.stack(bias_rows, axis=0)

    def __call__(self, x):
        # Flatten ALL leading dims (batch x num_queries) so every row shares a
        # single kernel launch.
        lead = x.shape[:-1]
        x2 = x.reshape(-1, x.shape[-1])
        y = _fused_mlp(
            x2, self.weights_mm, self.bias_pack,
            out_dims=self.out_dims,
            sigmoid_output=self.sigmoid_output,
            matmul_dtype=self.matmul_dtype,
            tile_n=self.tile_n,
        )
        return y.reshape(*lead, self.output_dim)


# ---------------------------------------------------------------------------
# Pure-JAX reference mirroring the same numerics (bf16 matmul, f32 accumulate,
# f32 ReLU/sigmoid).
# ---------------------------------------------------------------------------
def _ref_mlp(mlp: MLP, x):
    h = x.reshape(-1, x.shape[-1]).astype(jnp.float32)
    for i, (w, b) in enumerate(zip(mlp.weights, mlp.biases)):
        y = jnp.dot(h.astype(mlp.matmul_dtype), w.astype(mlp.matmul_dtype),
                    preferred_element_type=jnp.float32) + b
        h = jnp.maximum(y, 0.0) if i < mlp.num_layers - 1 else y
    if mlp.sigmoid_output:
        h = jax.nn.sigmoid(h)
    return h.reshape(*x.shape[:-1], h.shape[-1])


# ---------------------------------------------------------------------------
if __name__ == "__main__":
    key = jax.random.PRNGKey(0)
    k_x, k_p1, k_p2, k_p3, k_x2, k_x3 = jax.random.split(key, 6)

    # Shapes consistent with MaskDecoder.mask_embed:
    #   MLP(transformer_dim, transformer_dim, transformer_dim // 8, 5)
    # applied to query_out of shape (batch, num_queries, transformer_dim).
    batch, num_queries, transformer_dim = 2, 8, 64
    x = jax.random.normal(k_x, (batch, num_queries, transformer_dim),
                          dtype=jnp.float32)

    mask_embed = MLP(transformer_dim, transformer_dim, transformer_dim // 8,
                     num_layers=5, sigmoid_output=False, key=k_p1)
    out = jax.block_until_ready(mask_embed(x))
    ref = _ref_mlp(mask_embed, x)
    assert out.shape == (batch, num_queries, transformer_dim // 8), out.shape
    assert jnp.allclose(out, ref, atol=1e-4, rtol=1e-4), "mismatch (mask_embed)"

    # cls_embed is a single nn.Linear(transformer_dim, num_classes); the same
    # fused kernel covers it with num_layers=1 (no ReLU, no sigmoid).
    num_classes = 3
    cls_embed = MLP(transformer_dim, transformer_dim, num_classes,
                    num_layers=1, sigmoid_output=False, key=k_p2)
    cls_out = jax.block_until_ready(cls_embed(x))
    cls_ref = _ref_mlp(cls_embed, x)
    assert cls_out.shape == (batch, num_queries, num_classes), cls_out.shape
    assert jnp.allclose(cls_out, cls_ref, atol=1e-4, rtol=1e-4), \
        "mismatch (cls_embed)"

    # sigmoid_output branch.
    mlp_sig = MLP(32, 64, 16, num_layers=3, sigmoid_output=True, key=k_p3)
    x_sig = jax.random.normal(k_x2, (batch, num_queries, 32), dtype=jnp.float32)
    out_sig = jax.block_until_ready(mlp_sig(x_sig))
    ref_sig = _ref_mlp(mlp_sig, x_sig)
    assert out_sig.shape == (batch, num_queries, 16), out_sig.shape
    assert jnp.allclose(out_sig, ref_sig, atol=1e-4, rtol=1e-4), \
        "mismatch (sigmoid MLP)"

    # Tiled / multi-program path (grid > 1, N padded along the token axis only)
    # to exercise the "parallel" N grid used when many rows are batched.
    mlp_tiled = MLP(transformer_dim, transformer_dim, transformer_dim // 8,
                    num_layers=5, sigmoid_output=False, key=k_p1, tile_n=32)
    x_big = jax.random.normal(k_x3, (2, 40, transformer_dim), dtype=jnp.float32)
    out_big = jax.block_until_ready(mlp_tiled(x_big))   # N=80 -> pad 96, grid=3
    ref_big = _ref_mlp(mlp_tiled, x_big)
    assert out_big.shape == (2, 40, transformer_dim // 8), out_big.shape
    assert jnp.allclose(out_big, ref_big, atol=1e-4, rtol=1e-4), \
        "mismatch (tiled path)"

    print("KERNEL_OK")
</pallas_src>

<mosaic_0001>
module attributes {stable_mosaic.version = 11 : i64} {
  func.func @_fused_mlp_kernel(%arg0: i32, %arg1: memref<16x64xf32, #tpu.memory_space<vmem>>, %arg2: memref<64x64xbf16, #tpu.memory_space<vmem>>, %arg3: memref<64x64xbf16, #tpu.memory_space<vmem>>, %arg4: memref<64x64xbf16, #tpu.memory_space<vmem>>, %arg5: memref<64x64xbf16, #tpu.memory_space<vmem>>, %arg6: memref<64x8xbf16, #tpu.memory_space<vmem>>, %arg7: memref<5x64xf32, #tpu.memory_space<vmem>>, %arg8: memref<16x8xf32, #tpu.memory_space<vmem>>) attributes {dimension_semantics = [#tpu.dimension_semantics<parallel>], iteration_bounds = array<i64: 1>, scalar_prefetch = 0 : i64, scratch_operands = 0 : i64, tpu.core_type = #tpu.core_type<tc>, window_params = [{transform_indices = @transform_0, window_bounds = array<i64: 16, 64>}, {pipeline_mode = #tpu.pipeline_mode<synchronous>, transform_indices = @transform_1, window_bounds = array<i64: 64, 64>}, {pipeline_mode = #tpu.pipeline_mode<synchronous>, transform_indices = @transform_2, window_bounds = array<i64: 64, 64>}, {pipeline_mode = #tpu.pipeline_mode<synchronous>, transform_indices = @transform_3, window_bounds = array<i64: 64, 64>}, {pipeline_mode = #tpu.pipeline_mode<synchronous>, transform_indices = @transform_4, window_bounds = array<i64: 64, 64>}, {pipeline_mode = #tpu.pipeline_mode<synchronous>, transform_indices = @transform_5, window_bounds = array<i64: 64, 8>}, {pipeline_mode = #tpu.pipeline_mode<synchronous>, transform_indices = @transform_6, window_bounds = array<i64: 5, 64>}, {transform_indices = @transform_7, window_bounds = array<i64: 16, 8>}]} {
    %c0 = arith.constant 0 : index
    %c0_0 = arith.constant 0 : index
    %0 = vector.load %arg1[%c0, %c0_0] : memref<16x64xf32, #tpu.memory_space<vmem>>, vector<16x64xf32>
    %1 = arith.truncf %0 : vector<16x64xf32> to vector<16x64xbf16>
    %c0_1 = arith.constant 0 : index
    %c0_2 = arith.constant 0 : index
    %2 = vector.load %arg2[%c0_1, %c0_2] : memref<64x64xbf16, #tpu.memory_space<vmem>>, vector<64x64xbf16>
    %c0_3 = arith.constant 0 : index
    %c0_4 = arith.constant 0 : index
    %3 = vector.load %arg7[%c0_3, %c0_4] : memref<5x64xf32, #tpu.memory_space<vmem>>, vector<1x64xf32>
    %cst = arith.constant dense<0.000000e+00> : vector<16x64xf32>
    %4 = tpu.matmul %1, %2, %cst {dimension_numbers = #tpu.dot_dimension_numbers<[1], [0], [0], [1], [0, 0, 1, 1], [], []>} : vector<16x64xbf16>, vector<64x64xbf16>, vector<16x64xf32> -> vector<16x64xf32>
    %5 = vector.broadcast %3 : vector<1x64xf32> to vector<16x64xf32>
    %6 = arith.addf %4, %5 : vector<16x64xf32>
    %cst_5 = arith.constant 0.000000e+00 : f32
    %7 = vector.broadcast %cst_5 : f32 to vector<16x64xf32>
    %8 = arith.maximumf %6, %7 : vector<16x64xf32>
    %9 = arith.truncf %8 : vector<16x64xf32> to vector<16x64xbf16>
    %c0_6 = arith.constant 0 : index
    %c0_7 = arith.constant 0 : index
    %10 = vector.load %arg3[%c0_6, %c0_7] : memref<64x64xbf16, #tpu.memory_space<vmem>>, vector<64x64xbf16>
    %c1 = arith.constant 1 : index
    %c0_8 = arith.constant 0 : index
    %11 = vector.load %arg7[%c1, %c0_8] : memref<5x64xf32, #tpu.memory_space<vmem>>, vector<1x64xf32>
    %cst_9 = arith.constant dense<0.000000e+00> : vector<16x64xf32>
    %12 = tpu.matmul %9, %10, %cst_9 {dimension_numbers = #tpu.dot_dimension_numbers<[1], [0], [0], [1], [0, 0, 1, 1], [], []>} : vector<16x64xbf16>, vector<64x64xbf16>, vector<16x64xf32> -> vector<16x64xf32>
    %13 = vector.broadcast %11 : vector<1x64xf32> to vector<16x64xf32>
    %14 = arith.addf %12, %13 : vector<16x64xf32>
    %cst_10 = arith.constant 0.000000e+00 : f32
    %15 = vector.broadcast %cst_10 : f32 to vector<16x64xf32>
    %16 = arith.maximumf %14, %15 : vector<16x64xf32>
    %17 = arith.truncf %16 : vector<16x64xf32> to vector<16x64xbf16>
    %c0_11 = arith.constant 0 : index
    %c0_12 = arith.constant 0 : index
    %18 = vector.load %arg4[%c0_11, %c0_12] : memref<64x64xbf16, #tpu.memory_space<vmem>>, vector<64x64xbf16>
    %c2 = arith.constant 2 : index
    %c0_13 = arith.constant 0 : index
    %19 = vector.load %arg7[%c2, %c0_13] : memref<5x64xf32, #tpu.memory_space<vmem>>, vector<1x64xf32>
    %cst_14 = arith.constant dense<0.000000e+00> : vector<16x64xf32>
    %20 = tpu.matmul %17, %18, %cst_14 {dimension_numbers = #tpu.dot_dimension_numbers<[1], [0], [0], [1], [0, 0, 1, 1], [], []>} : vector<16x64xbf16>, vector<64x64xbf16>, vector<16x64xf32> -> vector<16x64xf32>
    %21 = vector.broadcast %19 : vector<1x64xf32> to vector<16x64xf32>
    %22 = arith.addf %20, %21 : vector<16x64xf32>
    %cst_15 = arith.constant 0.000000e+00 : f32
    %23 = vector.broadcast %cst_15 : f32 to vector<16x64xf32>
    %24 = arith.maximumf %22, %23 : vector<16x64xf32>
    %25 = arith.truncf %24 : vector<16x64xf32> to vector<16x64xbf16>
    %c0_16 = arith.constant 0 : index
    %c0_17 = arith.constant 0 : index
    %26 = vector.load %arg5[%c0_16, %c0_17] : memref<64x64xbf16, #tpu.memory_space<vmem>>, vector<64x64xbf16>
    %c3 = arith.constant 3 : index
    %c0_18 = arith.constant 0 : index
    %27 = vector.load %arg7[%c3, %c0_18] : memref<5x64xf32, #tpu.memory_space<vmem>>, vector<1x64xf32>
    %cst_19 = arith.constant dense<0.000000e+00> : vector<16x64xf32>
    %28 = tpu.matmul %25, %26, %cst_19 {dimension_numbers = #tpu.dot_dimension_numbers<[1], [0], [0], [1], [0, 0, 1, 1], [], []>} : vector<16x64xbf16>, vector<64x64xbf16>, vector<16x64xf32> -> vector<16x64xf32>
    %29 = vector.broadcast %27 : vector<1x64xf32> to vector<16x64xf32>
    %30 = arith.addf %28, %29 : vector<16x64xf32>
    %cst_20 = arith.constant 0.000000e+00 : f32
    %31 = vector.broadcast %cst_20 : f32 to vector<16x64xf32>
    %32 = arith.maximumf %30, %31 : vector<16x64xf32>
    %33 = arith.truncf %32 : vector<16x64xf32> to vector<16x64xbf16>
    %c0_21 = arith.constant 0 : index
    %c0_22 = arith.constant 0 : index
    %34 = vector.load %arg6[%c0_21, %c0_22] : memref<64x8xbf16, #tpu.memory_space<vmem>>, vector<64x8xbf16>
    %c4 = arith.constant 4 : index
    %c0_23 = arith.constant 0 : index
    %35 = vector.load %arg7[%c4, %c0_23] : memref<5x64xf32, #tpu.memory_space<vmem>>, vector<1x8xf32>
    %cst_24 = arith.constant dense<0.000000e+00> : vector<16x8xf32>
    %36 = tpu.matmul %33, %34, %cst_24 {dimension_numbers = #tpu.dot_dimension_numbers<[1], [0], [0], [1], [0, 0, 1, 1], [], []>} : vector<16x64xbf16>, vector<64x8xbf16>, vector<16x8xf32> -> vector<16x8xf32>
    %37 = vector.broadcast %35 : vector<1x8xf32> to vector<16x8xf32>
    %38 = arith.addf %36, %37 : vector<16x8xf32>
    %c0_25 = arith.constant 0 : index
    %c0_26 = arith.constant 0 : index
    %39 = vector.load %arg8[%c0_25, %c0_26] : memref<16x8xf32, #tpu.memory_space<vmem>>, vector<16x8xf32>
    tpu.vector_store %arg8[%c0_25, %c0_26], %38 {strides = array<i32>} : memref<16x8xf32, #tpu.memory_space<vmem>>, vector<16x8xf32>,
    return
  }
  func.func @transform_0(%arg0: i32) -> (i32, i32) {
    %c0_i32 = arith.constant 0 : i32
    %c0_i32_0 = arith.constant 0 : i32
    return %arg0, %c0_i32 : i32, i32
  }
  func.func @transform_1(%arg0: i32) -> (i32, i32) {
    %c0_i32 = arith.constant 0 : i32
    %c0_i32_0 = arith.constant 0 : i32
    %c0_i32_1 = arith.constant 0 : i32
    return %c0_i32, %c0_i32_0 : i32, i32
  }
  func.func @transform_2(%arg0: i32) -> (i32, i32) {
    %c0_i32 = arith.constant 0 : i32
    %c0_i32_0 = arith.constant 0 : i32
    %c0_i32_1 = arith.constant 0 : i32
    return %c0_i32, %c0_i32_0 : i32, i32
  }
  func.func @transform_3(%arg0: i32) -> (i32, i32) {
    %c0_i32 = arith.constant 0 : i32
    %c0_i32_0 = arith.constant 0 : i32
    %c0_i32_1 = arith.constant 0 : i32
    return %c0_i32, %c0_i32_0 : i32, i32
  }
  func.func @transform_4(%arg0: i32) -> (i32, i32) {
    %c0_i32 = arith.constant 0 : i32
    %c0_i32_0 = arith.constant 0 : i32
    %c0_i32_1 = arith.constant 0 : i32
    return %c0_i32, %c0_i32_0 : i32, i32
  }
  func.func @transform_5(%arg0: i32) -> (i32, i32) {
    %c0_i32 = arith.constant 0 : i32
    %c0_i32_0 = arith.constant 0 : i32
    %c0_i32_1 = arith.constant 0 : i32
    return %c0_i32, %c0_i32_0 : i32, i32
  }
  func.func @transform_6(%arg0: i32) -> (i32, i32) {
    %c0_i32 = arith.constant 0 : i32
    %c0_i32_0 = arith.constant 0 : i32
    %c0_i32_1 = arith.constant 0 : i32
    return %c0_i32, %c0_i32_0 : i32, i32
  }
  func.func @transform_7(%arg0: i32) -> (i32, i32) {
    %c0_i32 = arith.constant 0 : i32
    %c0_i32_0 = arith.constant 0 : i32
    return %arg0, %c0_i32 : i32, i32
  }
}

</mosaic_0001>

<llo_original>
// kernel: tpu_custom_call.1
$region0: #{tpu_custom_call.1}
  #allocation0 [shape = 'u32[]', space=smem, size = 0x4, offset = 0x4, fixed_abs, tag = 'smem constant byte address 0x4 - core index']
  #allocation1 [shape = 'u32[144,128]{1,0:T(1,128)}', space=vmem, size = 0x12000, scoped, tag = 'internal scratch']
  %s0 = inlined_call_operand.hbm [shape: f32[16,64], index: 0, kind: input, shape index: {}]
  %s1 = inlined_call_operand.vmem [shape: bf16[64,64], index: 1, kind: input, shape index: {}]
  %s2 = inlined_call_operand.hbm [shape: bf16[64,64], index: 2, kind: input, shape index: {}]
  %s3 = inlined_call_operand.hbm [shape: bf16[64,64], index: 3, kind: input, shape index: {}]
  %s4 = inlined_call_operand.hbm [shape: bf16[64,64], index: 4, kind: input, shape index: {}]
  %s5 = inlined_call_operand.vmem [shape: bf16[64,8], index: 5, kind: input, shape index: {}]
  %s6 = inlined_call_operand.vmem [shape: f32[5,64], index: 6, kind: input, shape index: {}]
  %s7 = inlined_call_operand.vmem [shape: f32[16,8], index: 7, kind: output, shape index: {}]
  %s8 = sld [smem:[#allocation0]]
  $region54: #{tpu_custom_call.1} parent=0
    _
  %s10 = ssub.s32 1, %s8
  %s11 = scalar_select 0, %s10, %s8
  $region1: #{tpu_custom_call.1} parent=0
    #allocation2 [shape = 'u8[8192]{0}', space=vmem, size = 0x2000, scoped, tag = 'input window, operand 0, single buffered']
    #allocation3 [shape = 's32[1]{0}', space=sflag, size = 0x4, scoped, tag = 'scoped memory for tpu_custom_call.1']
    #allocation4 [shape = 'u8[16384]{0}', space=vmem, size = 0x4000, scoped, tag = 'input window, operand 2, single buffered']
    #allocation5 [shape = 's32[1]{0}', space=sflag, size = 0x4, scoped, tag = 'scoped memory for tpu_custom_call.1']
    #allocation6 [shape = 'u8[16384]{0}', space=vmem, size = 0x4000, scoped, tag = 'input window, operand 3, single buffered']
    #allocation7 [shape = 'u8[16384]{0}', space=vmem, size = 0x4000, scoped, tag = 'input window, operand 4, single buffered']
    #allocation8 [shape = 's32[1]{0}', space=sflag, size = 0x4, scoped, tag = 'scoped memory for tpu_custom_call.1']
    %12 = vsyncpa [#allocation3], 0
    %13 = vsyncpa [#allocation5], 0
    %14 = vsyncpa [#allocation8], 0
    // Predicated region
    $region2: #{tpu_custom_call.1} parent=1 // pred_check
      _
    $region3: #{tpu_custom_call.1} parent=1 // pred_check_branch
      %16 = sbr.rel (0) target = $region5
    $region4: #{tpu_custom_call.1} parent=1 // pred_region
      %s18 = ssub.s32 256, 256
      %19 = vsyncadd [#allocation3], %s18
      %s20 = sshll.u32 [#allocation2], 4
      %s21 = int_to_ptr.vmem [resolvable:$true] %s20
      %26 = dma.hbm_to_vmem [thread:$0]  %s0, 256, %s21, [#allocation3], 128, 128, 8
    $region5: #{tpu_custom_call.1} parent=1 // pred_fallthru
      _
    // Predicated region
    $region6: #{tpu_custom_call.1} parent=1 // pred_check
      _
    $region7: #{tpu_custom_call.1} parent=1 // pred_check_branch
      %28 = sbr.rel (0) target = $region9
    $region8: #{tpu_custom_call.1} parent=1 // pred_region
      _
    $region9: #{tpu_custom_call.1} parent=1 // pred_fallthru
      _
    // Predicated region
    $region10: #{tpu_custom_call.1} parent=1 // pred_check
      _
    $region11: #{tpu_custom_call.1} parent=1 // pred_check_branch
      %30 = sbr.rel (0) target = $region13
    $region12: #{tpu_custom_call.1} parent=1 // pred_region
      %s32 = ssub.s32 512, 512
      %33 = vsyncadd [#allocation5], %s32
      %s34 = sshll.u32 [#allocation4], 4
      %s35 = int_to_ptr.vmem [resolvable:$true] %s34
      %40 = dma.hbm_to_vmem [thread:$0]  %s2, 512, %s35, [#allocation5], 64, 64, 4
    $region13: #{tpu_custom_call.1} parent=1 // pred_fallthru
      _
    // Predicated region
    $region14: #{tpu_custom_call.1} parent=1 // pred_check
      _
    $region15: #{tpu_custom_call.1} parent=1 // pred_check_branch
      %42 = sbr.rel (0) target = $region17
    $region16: #{tpu_custom_call.1} parent=1 // pred_region
      %s44 = ssub.s32 512, 512
      %45 = vsyncadd [#allocation5], %s44
      %s46 = sshll.u32 [#allocation6], 4
      %s47 = int_to_ptr.vmem [resolvable:$true] %s46
      %52 = dma.hbm_to_vmem [thread:$0]  %s3, 512, %s47, [#allocation5], 64, 64, 4
    $region17: #{tpu_custom_call.1} parent=1 // pred_fallthru
      _
    // Predicated region
    $region18: #{tpu_custom_call.1} parent=1 // pred_check
      _
    $region19: #{tpu_custom_call.1} parent=1 // pred_check_branch
      %54 = sbr.rel (0) target = $region21
    $region20: #{tpu_custom_call.1} parent=1 // pred_region
      %s56 = ssub.s32 512, 512
      %57 = vsyncadd [#allocation8], %s56
      %s58 = sshll.u32 [#allocation7], 4
      %s59 = int_to_ptr.vmem [resolvable:$true] %s58
      %64 = dma.hbm_to_vmem [thread:$0]  %s4, 512, %s59, [#allocation8], 64, 64, 4
    $region21: #{tpu_custom_call.1} parent=1 // pred_fallthru
      _
    // Predicated region
    $region22: #{tpu_custom_call.1} parent=1 // pred_check
      _
    $region23: #{tpu_custom_call.1} parent=1 // pred_check_branch
      %66 = sbr.rel (0) target = $region25
    $region24: #{tpu_custom_call.1} parent=1 // pred_region
      _
    $region25: #{tpu_custom_call.1} parent=1 // pred_fallthru
      _
    // Predicated region
    $region26: #{tpu_custom_call.1} parent=1 // pred_check
      _
    $region27: #{tpu_custom_call.1} parent=1 // pred_check_branch
      %68 = sbr.rel (0) target = $region29
    $region28: #{tpu_custom_call.1} parent=1 // pred_region
      _
    $region29: #{tpu_custom_call.1} parent=1 // pred_fallthru
      _
    // Predicated region
    $region30: #{tpu_custom_call.1} parent=1 // pred_check
      _
    $region31: #{tpu_custom_call.1} parent=1 // pred_check_branch
      %70 = sbr.rel (0) target = $region33
    $region32: #{tpu_custom_call.1} parent=1 // pred_region
      %71 = dma.done [#allocation3], 256
    $region33: #{tpu_custom_call.1} parent=1 // pred_fallthru
      _
    // Predicated region
    $region34: #{tpu_custom_call.1} parent=1 // pred_check
      _
    $region35: #{tpu_custom_call.1} parent=1 // pred_check_branch
      %73 = sbr.rel (0) target = $region37
    $region36: #{tpu_custom_call.1} parent=1 // pred_region
      %74 = dma.done [#allocation5], 512
    $region37: #{tpu_custom_call.1} parent=1 // pred_fallthru
      _
    // Predicated region
    $region38: #{tpu_custom_call.1} parent=1 // pred_check
      _
    $region39: #{tpu_custom_call.1} parent=1 // pred_check_branch
      %76 = sbr.rel (0) target = $region41
    $region40: #{tpu_custom_call.1} parent=1 // pred_region
      %77 = dma.done [#allocation5], 512
    $region41: #{tpu_custom_call.1} parent=1 // pred_fallthru
      _
    // Predicated region
    $region42: #{tpu_custom_call.1} parent=1 // pred_check
      _
    $region43: #{tpu_custom_call.1} parent=1 // pred_check_branch
      %79 = sbr.rel (0) target = $region45
    $region44: #{tpu_custom_call.1} parent=1 // pred_region
      %80 = dma.done [#allocation8], 512
    $region45: #{tpu_custom_call.1} parent=1 // pred_fallthru
      _
    %v82 = vld [vmem:[#allocation2] sm:$0xff]
    %v83 = vld [vmem:[#allocation2 + $0x8] sm:$0xff]
    %v84 = vpack.c.bf16 %v83, %v82
    %v85 = vld [vmem:[%s1] sm:$0xf]
    %v86 = vld [vmem:[%s1 + $0x4] sm:$0xf]
    %v87 = vld [vmem:[%s1 + $0x8] sm:$0xf]
    %v88 = vld [vmem:[%s1 + $0xc] sm:$0xf]
    %v89 = vld [vmem:[%s1 + $0x10] sm:$0xf]
    %v90 = vld [vmem:[%s1 + $0x14] sm:$0xf]
    %v91 = vld [vmem:[%s1 + $0x18] sm:$0xf]
    %v92 = vld [vmem:[%s1 + $0x1c] sm:$0xf]
    %v93 = vld [vmem:[%s6] sm:$0x1]
    %v94 = vlaneseq
    %v95 = vshrl.u32 %v94, 7
    %v96 = vsub.s32 0, %v95
    %v97 = vrot.slane %v93, %v96
    %v106 = vunpack.c.l.b16 %v85
    %v107 = vunpack.c.l.b16 %v86
    %v108 = vunpack.c.l.b16 %v87
    %v109 = vunpack.c.l.b16 %v88
    %v110 = vunpack.c.l.b16 %v89
    %v111 = vunpack.c.l.b16 %v90
    %v112 = vunpack.c.l.b16 %v91
    %v113 = vunpack.c.l.b16 %v92
    %v114 = vpack.c.b16 %v107, %v106
    %v115 = vpack.c.b16 %v109, %v108
    %v116 = vpack.c.b16 %v111, %v110
    %v117 = vpack.c.b16 %v113, %v112
    %vm122 = vcmask 523264
    %v124 = vsel %vm122, %v84, 0
    %126 = vmatprep.subr.bf16.mxu0 0
    %127 = vmatpush1.bf16.msra.mxu0 %v114
    %128 = vmatprep.subr.bf16.mxu0 0
    %129 = vmatpush1.bf16.msra.mxu0 %v115
    %130 = vmatprep.subr.bf16.mxu0 0
    %131 = vmatpush1.bf16.msra.mxu0 %v116
    %132 = vmatprep.subr.bf16.mxu0 0
    %133 = vmatpush1.bf16.msra.mxu0 %v117
    %134 = vmatprep.subr.bf16.mxu0 0
    %135 = vmatpush1.bf16.msra.mxu0 0
    %136 = vmatprep.subr.bf16.mxu0 0
    %137 = vmatpush1.bf16.msra.mxu0 0
    %138 = vmatprep.subr.bf16.mxu0 0
    %139 = vmatpush1.bf16.msra.mxu0 0
    %140 = vmatprep.subr.bf16.mxu0 0
    %141 = vmatpush1.bf16.msra.mxu0 0
    %142 = vmatprep.subr.bf16.mxu0 0
    %143 = vmatpush1.bf16.msra.mxu0 0
    %144 = vmatprep.subr.bf16.mxu0 0
    %145 = vmatpush1.bf16.msra.mxu0 0
    %146 = vmatprep.subr.bf16.mxu0 0
    %147 = vmatpush1.bf16.msra.mxu0 0
    %148 = vmatprep.subr.bf16.mxu0 0
    %149 = vmatpush1.bf16.msra.mxu0 0
    %150 = vmatprep.subr.bf16.mxu0 0
    %151 = vmatpush1.bf16.msra.mxu0 0
    %152 = vmatprep.subr.bf16.mxu0 0
    %153 = vmatpush1.bf16.msra.mxu0 0
    %154 = vmatprep.subr.bf16.mxu0 0
    %155 = vmatpush1.bf16.msra.mxu0 0
    %156 = vmatprep.subr.bf16.mxu0 0
    %157 = vmatpush1.bf16.msra.mxu0 0
    %158 = vmatprep.mubr.bf16.mxu0 0
    %159 = vmatmul.mubr.bf16.gmra.mrb[0].mxu0 %v124
    %v160 = vpop.f32.mrb[0].mxu0
    %v161 = vadd.f32 %v97, %v160
    %v162 = vpop.f32.mrb[0].mxu0
    %v163 = vpop.f32.mrb[0].mxu0
    %v164 = vadd.f32 %v97, %v163
    %v165 = vpop.f32.mrb[0].mxu0
    %166 = vdwg.mxu0
    %v167 = vmax.f32 %v161, 0.0
    %v168 = vmax.f32 %v164, 0.0
    %v169 = vpack.c.bf16 %v168, %v167
    %v170 = vld [vmem:[#allocation4] sm:$0xf]
    %v171 = vld [vmem:[#allocation4 + $0x4] sm:$0xf]
    %v172 = vld [vmem:[#allocation4 + $0x8] sm:$0xf]
    %v173 = vld [vmem:[#allocation4 + $0xc] sm:$0xf]
    %v174 = vld [vmem:[#allocation4 + $0x10] sm:$0xf]
    %v175 = vld [vmem:[#allocation4 + $0x14] sm:$0xf]
    %v176 = vld [vmem:[#allocation4 + $0x18] sm:$0xf]
    %v177 = vld [vmem:[#allocation4 + $0x1c] sm:$0xf]
    %v178 = vld [vmem:[%s6 + $0x1] sm:$0x1]
    %v179 = vlaneseq
    %v180 = vshrl.u32 %v179, 7
    %v181 = vsub.s32 0, %v180
    %v182 = vrot.slane %v178, %v181
    %v191 = vunpack.c.l.b16 %v170
    %v192 = vunpack.c.l.b16 %v171
    %v193 = vunpack.c.l.b16 %v172
    %v194 = vunpack.c.l.b16 %v173
    %v195 = vunpack.c.l.b16 %v174
    %v196 = vunpack.c.l.b16 %v175
    %v197 = vunpack.c.l.b16 %v176
    %v198 = vunpack.c.l.b16 %v177
    %v199 = vpack.c.b16 %v192, %v191
    %v200 = vpack.c.b16 %v194, %v193
    %v201 = vpack.c.b16 %v196, %v195
    %v202 = vpack.c.b16 %v198, %v197
    %v208 = vsel %vm122, %v169, 0
    %210 = vmatprep.subr.bf16.mxu0 0
    %211 = vmatpush1.bf16.msra.mxu0 %v199
    %212 = vmatprep.subr.bf16.mxu0 0
    %213 = vmatpush1.bf16.msra.mxu0 %v200
    %214 = vmatprep.subr.bf16.mxu0 0
    %215 = vmatpush1.bf16.msra.mxu0 %v201
    %216 = vmatprep.subr.bf16.mxu0 0
    %217 = vmatpush1.bf16.msra.mxu0 %v202
    %218 = vmatprep.subr.bf16.mxu0 0
    %219 = vmatpush1.bf16.msra.mxu0 0
    %220 = vmatprep.subr.bf16.mxu0 0
    %221 = vmatpush1.bf16.msra.mxu0 0
    %222 = vmatprep.subr.bf16.mxu0 0
    %223 = vmatpush1.bf16.msra.mxu0 0
    %224 = vmatprep.subr.bf16.mxu0 0
    %225 = vmatpush1.bf16.msra.mxu0 0
    %226 = vmatprep.subr.bf16.mxu0 0
    %227 = vmatpush1.bf16.msra.mxu0 0
    %228 = vmatprep.subr.bf16.mxu0 0
    %229 = vmatpush1.bf16.msra.mxu0 0
    %230 = vmatprep.subr.bf16.mxu0 0
    %231 = vmatpush1.bf16.msra.mxu0 0
    %232 = vmatprep.subr.bf16.mxu0 0
    %233 = vmatpush1.bf16.msra.mxu0 0
    %234 = vmatprep.subr.bf16.mxu0 0
    %235 = vmatpush1.bf16.msra.mxu0 0
    %236 = vmatprep.subr.bf16.mxu0 0
    %237 = vmatpush1.bf16.msra.mxu0 0
    %238 = vmatprep.subr.bf16.mxu0 0
    %239 = vmatpush1.bf16.msra.mxu0 0
    %240 = vmatprep.subr.bf16.mxu0 0
    %241 = vmatpush1.bf16.msra.mxu0 0
    %242 = vmatprep.mubr.bf16.mxu0 0
    %243 = vmatmul.mubr.bf16.gmra.mrb[0].mxu0 %v208
    %v244 = vpop.f32.mrb[0].mxu0
    %v245 = vadd.f32 %v182, %v244
    %v246 = vpop.f32.mrb[0].mxu0
    %v247 = vpop.f32.mrb[0].mxu0
    %v248 = vadd.f32 %v182, %v247
    %v249 = vpop.f32.mrb[0].mxu0
    %250 = vdwg.mxu0
    %v251 = vmax.f32 %v245, 0.0
    %v252 = vmax.f32 %v248, 0.0
    %v253 = vpack.c.bf16 %v252, %v251
    %v254 = vld [vmem:[#allocation6] sm:$0xf]
    %v255 = vld [vmem:[#allocation6 + $0x4] sm:$0xf]
    %v256 = vld [vmem:[#allocation6 + $0x8] sm:$0xf]
    %v257 = vld [vmem:[#allocation6 + $0xc] sm:$0xf]
    %v258 = vld [vmem:[#allocation6 + $0x10] sm:$0xf]
    %v259 = vld [vmem:[#allocation6 + $0x14] sm:$0xf]
    %v260 = vld [vmem:[#allocation6 + $0x18] sm:$0xf]
    %v261 = vld [vmem:[#allocation6 + $0x1c] sm:$0xf]
    %v262 = vld [vmem:[%s6 + $0x2] sm:$0x1]
    %v263 = vlaneseq
    %v264 = vshrl.u32 %v263, 7
    %v265 = vsub.s32 0, %v264
    %v266 = vrot.slane %v262, %v265
    %v275 = vunpack.c.l.b16 %v254
    %v276 = vunpack.c.l.b16 %v255
    %v277 = vunpack.c.l.b16 %v256
    %v278 = vunpack.c.l.b16 %v257
    %v279 = vunpack.c.l.b16 %v258
    %v280 = vunpack.c.l.b16 %v259
    %v281 = vunpack.c.l.b16 %v260
    %v282 = vunpack.c.l.b16 %v261
    %v283 = vpack.c.b16 %v276, %v275
    %v284 = vpack.c.b16 %v278, %v277
    %v285 = vpack.c.b16 %v280, %v279
    %v286 = vpack.c.b16 %v282, %v281
    %v292 = vsel %vm122, %v253, 0
    %294 = vmatprep.subr.bf16.mxu0 0
    %295 = vmatpush1.bf16.msra.mxu0 %v283
    %296 = vmatprep.subr.bf16.mxu0 0
    %297 = vmatpush1.bf16.msra.mxu0 %v284
    %298 = vmatprep.subr.bf16.mxu0 0
    %299 = vmatpush1.bf16.msra.mxu0 %v285
    %300 = vmatprep.subr.bf16.mxu0 0
    %301 = vmatpush1.bf16.msra.mxu0 %v286
    %302 = vmatprep.subr.bf16.mxu0 0
    %303 = vmatpush1.bf16.msra.mxu0 0
    %304 = vmatprep.subr.bf16.mxu0 0
    %305 = vmatpush1.bf16.msra.mxu0 0
    %306 = vmatprep.subr.bf16.mxu0 0
    %307 = vmatpush1.bf16.msra.mxu0 0
    %308 = vmatprep.subr.bf16.mxu0 0
    %309 = vmatpush1.bf16.msra.mxu0 0
    %310 = vmatprep.subr.bf16.mxu0 0
    %311 = vmatpush1.bf16.msra.mxu0 0
    %312 = vmatprep.subr.bf16.mxu0 0
    %313 = vmatpush1.bf16.msra.mxu0 0
    %314 = vmatprep.subr.bf16.mxu0 0
    %315 = vmatpush1.bf16.msra.mxu0 0
    %316 = vmatprep.subr.bf16.mxu0 0
    %317 = vmatpush1.bf16.msra.mxu0 0
    %318 = vmatprep.subr.bf16.mxu0 0
    %319 = vmatpush1.bf16.msra.mxu0 0
    %320 = vmatprep.subr.bf16.mxu0 0
    %321 = vmatpush1.bf16.msra.mxu0 0
    %322 = vmatprep.subr.bf16.mxu0 0
    %323 = vmatpush1.bf16.msra.mxu0 0
    %324 = vmatprep.subr.bf16.mxu0 0
    %325 = vmatpush1.bf16.msra.mxu0 0
    %326 = vmatprep.mubr.bf16.mxu0 0
    %327 = vmatmul.mubr.bf16.gmra.mrb[0].mxu0 %v292
    %v328 = vpop.f32.mrb[0].mxu0
    %v329 = vadd.f32 %v266, %v328
    %v330 = vpop.f32.mrb[0].mxu0
    %v331 = vpop.f32.mrb[0].mxu0
    %v332 = vadd.f32 %v266, %v331
    %v333 = vpop.f32.mrb[0].mxu0
    %334 = vdwg.mxu0
    %v335 = vmax.f32 %v329, 0.0
    %v336 = vmax.f32 %v332, 0.0
    %v337 = vpack.c.bf16 %v336, %v335
    %v338 = vld [vmem:[#allocation7] sm:$0xf]
    %v339 = vld [vmem:[#allocation7 + $0x4] sm:$0xf]
    %v340 = vld [vmem:[#allocation7 + $0x8] sm:$0xf]
    %v341 = vld [vmem:[#allocation7 + $0xc] sm:$0xf]
    %v342 = vld [vmem:[#allocation7 + $0x10] sm:$0xf]
    %v343 = vld [vmem:[#allocation7 + $0x14] sm:$0xf]
    %v344 = vld [vmem:[#allocation7 + $0x18] sm:$0xf]
    %v345 = vld [vmem:[#allocation7 + $0x1c] sm:$0xf]
    %v346 = vld [vmem:[%s6 + $0x3] sm:$0x1]
    %v347 = vlaneseq
    %v348 = vshrl.u32 %v347, 7
    %v349 = vsub.s32 0, %v348
    %v350 = vrot.slane %v346, %v349
    %v359 = vunpack.c.l.b16 %v338
    %v360 = vunpack.c.l.b16 %v339
    %v361 = vunpack.c.l.b16 %v340
    %v362 = vunpack.c.l.b16 %v341
    %v363 = vunpack.c.l.b16 %v342
    %v364 = vunpack.c.l.b16 %v343
    %v365 = vunpack.c.l.b16 %v344
    %v366 = vunpack.c.l.b16 %v345
    %v367 = vpack.c.b16 %v360, %v359
    %v368 = vpack.c.b16 %v362, %v361
    %v369 = vpack.c.b16 %v364, %v363
    %v370 = vpack.c.b16 %v366, %v365
    %v376 = vsel %vm122, %v337, 0
    %378 = vmatprep.subr.bf16.mxu0 0
    %379 = vmatpush1.bf16.msra.mxu0 %v367
    %380 = vmatprep.subr.bf16.mxu0 0
    %381 = vmatpush1.bf16.msra.mxu0 %v368
    %382 = vmatprep.subr.bf16.mxu0 0
    %383 = vmatpush1.bf16.msra.mxu0 %v369
    %384 = vmatprep.subr.bf16.mxu0 0
    %385 = vmatpush1.bf16.msra.mxu0 %v370
    %386 = vmatprep.subr.bf16.mxu0 0
    %387 = vmatpush1.bf16.msra.mxu0 0
    %388 = vmatprep.subr.bf16.mxu0 0
    %389 = vmatpush1.bf16.msra.mxu0 0
    %390 = vmatprep.subr.bf16.mxu0 0
    %391 = vmatpush1.bf16.msra.mxu0 0
    %392 = vmatprep.subr.bf16.mxu0 0
    %393 = vmatpush1.bf16.msra.mxu0 0
    %394 = vmatprep.subr.bf16.mxu0 0
    %395 = vmatpush1.bf16.msra.mxu0 0
    %396 = vmatprep.subr.bf16.mxu0 0
    %397 = vmatpush1.bf16.msra.mxu0 0
    %398 = vmatprep.subr.bf16.mxu0 0
    %399 = vmatpush1.bf16.msra.mxu0 0
    %400 = vmatprep.subr.bf16.mxu0 0
    %401 = vmatpush1.bf16.msra.mxu0 0
    %402 = vmatprep.subr.bf16.mxu0 0
    %403 = vmatpush1.bf16.msra.mxu0 0
    %404 = vmatprep.subr.bf16.mxu0 0
    %405 = vmatpush1.bf16.msra.mxu0 0
    %406 = vmatprep.subr.bf16.mxu0 0
    %407 = vmatpush1.bf16.msra.mxu0 0
    %408 = vmatprep.subr.bf16.mxu0 0
    %409 = vmatpush1.bf16.msra.mxu0 0
    %410 = vmatprep.mubr.bf16.mxu0 0
    %411 = vmatmul.mubr.bf16.gmra.mrb[0].mxu0 %v376
    %v412 = vpop.f32.mrb[0].mxu0
    %v413 = vadd.f32 %v350, %v412
    %v414 = vpop.f32.mrb[0].mxu0
    %v415 = vpop.f32.mrb[0].mxu0
    %v416 = vadd.f32 %v350, %v415
    %v417 = vpop.f32.mrb[0].mxu0
    %418 = vdwg.mxu0
    %v419 = vmax.f32 %v413, 0.0
    %v420 = vmax.f32 %v416, 0.0
    %v421 = vpack.c.bf16 %v420, %v419
    %v422 = vld [vmem:[%s5] sm:$0xf]
    %v423 = vld [vmem:[%s5 + $0x4] sm:$0xf]
    %v424 = vld [vmem:[%s5 + $0x8] sm:$0xf]
    %v425 = vld [vmem:[%s5 + $0xc] sm:$0xf]
    %v426 = vld [vmem:[%s5 + $0x10] sm:$0xf]
    %v427 = vld [vmem:[%s5 + $0x14] sm:$0xf]
    %v428 = vld [vmem:[%s5 + $0x18] sm:$0xf]
    %v429 = vld [vmem:[%s5 + $0x1c] sm:$0xf]
    %v430 = vld [vmem:[%s6 + $0x4] sm:$0x1]
    %v431 = vlaneseq
    %v432 = vshrl.u32 %v431, 7
    %v433 = vsub.s32 0, %v432
    %v434 = vrot.slane %v430, %v433
    %v443 = vunpack.c.l.b16 %v422
    %v444 = vunpack.c.l.b16 %v423
    %v445 = vunpack.c.l.b16 %v424
    %v446 = vunpack.c.l.b16 %v425
    %v447 = vunpack.c.l.b16 %v426
    %v448 = vunpack.c.l.b16 %v427
    %v449 = vunpack.c.l.b16 %v428
    %v450 = vunpack.c.l.b16 %v429
    %v451 = vpack.c.b16 %v444, %v443
    %v452 = vpack.c.b16 %v446, %v445
    %v453 = vpack.c.b16 %v448, %v447
    %v454 = vpack.c.b16 %v450, %v449
    %v460 = vsel %vm122, %v421, 0
    %462 = vmatprep.subr.bf16.mxu0 0
    %463 = vmatpush1.bf16.msra.mxu0 %v451
    %464 = vmatprep.subr.bf16.mxu0 0
    %465 = vmatpush1.bf16.msra.mxu0 %v452
    %466 = vmatprep.subr.bf16.mxu0 0
    %467 = vmatpush1.bf16.msra.mxu0 %v453
    %468 = vmatprep.subr.bf16.mxu0 0
    %469 = vmatpush1.bf16.msra.mxu0 %v454
    %470 = vmatprep.subr.bf16.mxu0 0
    %471 = vmatpush1.bf16.msra.mxu0 0
    %472 = vmatprep.subr.bf16.mxu0 0
    %473 = vmatpush1.bf16.msra.mxu0 0
    %474 = vmatprep.subr.bf16.mxu0 0
    %475 = vmatpush1.bf16.msra.mxu0 0
    %476 = vmatprep.subr.bf16.mxu0 0
    %477 = vmatpush1.bf16.msra.mxu0 0
    %478 = vmatprep.subr.bf16.mxu0 0
    %479 = vmatpush1.bf16.msra.mxu0 0
    %480 = vmatprep.subr.bf16.mxu0 0
    %481 = vmatpush1.bf16.msra.mxu0 0
    %482 = vmatprep.subr.bf16.mxu0 0
    %483 = vmatpush1.bf16.msra.mxu0 0
    %484 = vmatprep.subr.bf16.mxu0 0
    %485 = vmatpush1.bf16.msra.mxu0 0
    %486 = vmatprep.subr.bf16.mxu0 0
    %487 = vmatpush1.bf16.msra.mxu0 0
    %488 = vmatprep.subr.bf16.mxu0 0
    %489 = vmatpush1.bf16.msra.mxu0 0
    %490 = vmatprep.subr.bf16.mxu0 0
    %491 = vmatpush1.bf16.msra.mxu0 0
    %492 = vmatprep.subr.bf16.mxu0 0
    %493 = vmatpush1.bf16.msra.mxu0 0
    %494 = vmatprep.mubr.bf16.mxu0 0
    %495 = vmatmul.mubr.bf16.gmra.mrb[0].mxu0 %v460
    %v496 = vpop.f32.mrb[0].mxu0
    %v497 = vadd.f32 %v434, %v496
    %v498 = vpop.f32.mrb[0].mxu0
    %v499 = vpop.f32.mrb[0].mxu0
    %v500 = vadd.f32 %v434, %v499
    %v501 = vpop.f32.mrb[0].mxu0
    %502 = vdwg.mxu0
    %vm503 = vcmask 64512
    %504 = vst.msk [vmem:[%s7] sm:$0xff] %vm503, %v497
    %505 = vst.msk [vmem:[%s7 + $0x8] sm:$0xff] %vm503, %v500
    // Predicated region
    $region46: #{tpu_custom_call.1} parent=1 // pred_check
      _
    $region47: #{tpu_custom_call.1} parent=1 // pred_check_branch
      %507 = sbr.rel (0) target = $region49
    $region48: #{tpu_custom_call.1} parent=1 // pred_region
      _
    $region49: #{tpu_custom_call.1} parent=1 // pred_fallthru
      _
    // Predicated region
    $region50: #{tpu_custom_call.1} parent=1 // pred_check
      _
    $region51: #{tpu_custom_call.1} parent=1 // pred_check_branch
      %509 = sbr.rel (0) target = $region53
    $region52: #{tpu_custom_call.1} parent=1 // pred_region
      _
    $region53: #{tpu_custom_call.1} parent=1 // pred_fallthru
      _
    %510 = vsyncpa [#allocation3], 1
    %511 = vsyncpa [#allocation5], 1
    %512 = vsyncpa [#allocation8], 1

</llo_original>
